<compile_context>
chip_gen: v7x
topology: tpu7x:2x2x1
jax: 0.10.0
libtpu: 0.0.40
codegen_flags: <defaults>
</compile_context>

<pallas_src>
import math
from functools import partial

import numpy as np
import jax
import jax.numpy as jnp
from jax.experimental import pallas as pl
from jax.experimental.pallas import tpu as pltpu


def _round_up(x, m):
    return (x + m - 1) // m * m


# ---------------------------------------------------------------------------
# Packed (lane-dense) kernel: emb_dim not a multiple of 128.
#   bits_ref: (TR, 2*n_words) uint32 -- word w of col c at column c*n_words+w;
#                                       bit (g-32w) = index of edge g in row
#   tab_ref : (4, W)  f32           -- rows [C00, C01, C10, C11], each combo
#                                      tiled G times along lanes (W = G*D)
#   mask_ref: (n_words, W) uint32   -- per-lane group bit for word w (0 if the
#                                      lane's group lives in another word)
#   out_ref : (TR, W)               -- W multiple of 128 -> unmasked vst
# ---------------------------------------------------------------------------
def _make_packed_kernel(n_words):
    def kernel(bits_ref, tab_ref, mask_ref, out_ref):
        def select(col):
            c0 = col * n_words
            s = (bits_ref[:, c0:c0 + 1] & mask_ref[0:1, :]) != 0
            for w in range(1, n_words):
                s = jnp.logical_or(
                    s, (bits_ref[:, c0 + w:c0 + w + 1] & mask_ref[w:w + 1, :]) != 0)
            return s

        sel_t = select(0)                                   # (TR, W) bool
        sel_d = select(1)                                   # (TR, W) bool
        r0 = jnp.where(sel_d, tab_ref[1:2, :], tab_ref[0:1, :])   # type == 0
        r1 = jnp.where(sel_d, tab_ref[3:4, :], tab_ref[2:3, :])   # type == 1
        out_ref[...] = jnp.where(sel_t, r1, r0).astype(out_ref.dtype)

    return kernel


# ---------------------------------------------------------------------------
# Simple kernel: emb_dim already a multiple of 128 (lane-dense as-is).
#   idx_ref: (TR, 2) int32 ; tab_ref: (4, D) f32 [C00, C01, C10, C11]
# ---------------------------------------------------------------------------
def _ast_edge_simple_kernel(idx_ref, tab_ref, out_ref):
    sel_t = idx_ref[:, 0:1] != 0                            # (TR, 1) bool
    sel_d = idx_ref[:, 1:2] != 0                            # (TR, 1) bool
    r0 = jnp.where(sel_d, tab_ref[1:2, :], tab_ref[0:1, :])
    r1 = jnp.where(sel_d, tab_ref[3:4, :], tab_ref[2:3, :])
    out_ref[...] = jnp.where(sel_t, r1, r0).astype(out_ref.dtype)


def _combo_rows(table_type, table_dir):
    """C[t,d] = T[t] + D[d] -- exact f32 adds, identical to the gather ref."""
    t = table_type.astype(jnp.float32)
    d = table_dir.astype(jnp.float32)
    return (t[0] + d[0], t[0] + d[1], t[1] + d[0], t[1] + d[1])


@partial(jax.jit, static_argnames=("tile_rows", "out_dtype", "trim_output"))
def ast_edge_encoder(edge_attr, table_type, table_dir, *, tile_rows=2048,
                     out_dtype=jnp.float32, trim_output=True):
    """edge_attr: (E, 2) int ; table_type/table_dir: (2, D) -> (E, D) out_dtype.

    For maximum performance embed this call inside the consumer's jit (so the
    trailing [:E] trim fuses) or pass trim_output=False and slice downstream.
    """
    E = edge_attr.shape[0]
    D = table_type.shape[1]
    out_size = np.dtype(out_dtype).itemsize

    # {0,1} contract; & 1 folds bad inputs instead of erroring like nn.Embedding.
    idx = edge_attr.astype(jnp.int32) & 1                              # (E, 2)
    c00, c01, c10, c11 = _combo_rows(table_type, table_dir)            # 4 x (D,)

    def pick_tile(rows_pad, W):
        tr_cap = max(8, ((8 << 20) // (W * out_size)) // 8 * 8)   # <=8 MiB block
        tr = max(8, (min(tile_rows, tr_cap, rows_pad) // 8) * 8)

        def budget(t):  # double-buffered: out + lane-padded idx + resident tabs
            return 2 * (t * W * out_size + t * 128 * 4 + 2 * 8 * W * 4) + (2 << 20)

        while tr > 8 and budget(tr) > (48 << 20):
            tr = max(8, (tr // 2 // 8) * 8)
        vmem = int(min(max(budget(tr), 16 << 20), 60 << 20))
        return tr, vmem

    # ------------------------------------------------------------------ #
    # Simple path: emb_dim already lane-dense.
    # ------------------------------------------------------------------ #
    if D % 128 == 0:
        rows_pad = max(8, _round_up(E, 8))
        TR, vmem_limit = pick_tile(rows_pad, D)

        idx_p = jnp.zeros((rows_pad, 2), jnp.int32).at[:E].set(idx)
        tab = jnp.stack([c00, c01, c10, c11], axis=0)                  # (4, D)

        out = pl.pallas_call(
            _ast_edge_simple_kernel,
            out_shape=jax.ShapeDtypeStruct((rows_pad, D), out_dtype),
            grid_spec=pl.GridSpec(
                grid=(pl.cdiv(rows_pad, TR),),            # ragged last block OK
                in_specs=[
                    pl.BlockSpec((TR, 2), lambda i: (i, 0)),
                    pl.BlockSpec((4, D), lambda i: (0, 0)),    # resident table
                ],
                out_specs=pl.BlockSpec((TR, D), lambda i: (i, 0)),
            ),
            compiler_params=pltpu.CompilerParams(
                dimension_semantics=("parallel",),
                vmem_limit_bytes=vmem_limit),
        )(idx_p, tab)
        return out[:E] if trim_output else out

    # ------------------------------------------------------------------ #
    # Packed path: G edges per lane-dense row of W = G*D lanes.
    # ------------------------------------------------------------------ #
    g_min = 128 // math.gcd(D, 128)             # smallest G with G*D % 128 == 0
    G = g_min
    while G * D < 512 and G * 2 <= 128:         # widen rows toward >=512 lanes
        G *= 2
    n_words = -(-G // 32)                       # uint32 words per index column
    W = G * D

    num_rows = -(-E // G)
    rows_pad = max(8, _round_up(num_rows, 8))
    E_pad = rows_pad * G
    TR, vmem_limit = pick_tile(rows_pad, W)

    # Bit-pack the G per-row indices into n_words uint32 per (row, column).
    idx_u = idx.astype(jnp.uint32)
    idx_p = jnp.zeros((E_pad, 2), jnp.uint32).at[:E].set(idx_u)        # (E_pad,2)
    idx_rows = idx_p.reshape(rows_pad, G, 2)                           # (R, G, 2)
    Gp = n_words * 32
    if Gp != G:
        idx_rows = jnp.pad(idx_rows, ((0, 0), (0, Gp - G), (0, 0)))
    idx_rows = idx_rows.reshape(rows_pad, n_words, 32, 2)
    shifts = jnp.arange(32, dtype=jnp.uint32)[None, None, :, None]
    words = jnp.sum(idx_rows << shifts, axis=2, dtype=jnp.uint32)      # (R, nw, 2)
    bits = jnp.transpose(words, (0, 2, 1)).reshape(rows_pad, 2 * n_words)

    # Resident combo table tiled G times along lanes + per-word lane masks.
    tab = jnp.stack([jnp.tile(c00, G), jnp.tile(c01, G),
                     jnp.tile(c10, G), jnp.tile(c11, G)], axis=0)      # (4, W)
    lane_group = jnp.arange(W, dtype=jnp.int32) // D                   # (W,)
    bit_in_word = (lane_group % 32).astype(jnp.uint32)
    word_of_lane = lane_group // 32
    base_mask = jnp.uint32(1) << bit_in_word                           # (W,)
    mask = jnp.where(word_of_lane[None, :] ==
                     jnp.arange(n_words, dtype=jnp.int32)[:, None],
                     base_mask[None, :], jnp.uint32(0))                # (nw, W)

    out_packed = pl.pallas_call(
        _make_packed_kernel(n_words),
        out_shape=jax.ShapeDtypeStruct((rows_pad, W), out_dtype),
        grid_spec=pl.GridSpec(
            grid=(pl.cdiv(rows_pad, TR),),                # ragged last block OK
            in_specs=[
                pl.BlockSpec((TR, 2 * n_words), lambda i: (i, 0)),  # bit-packed idx
                pl.BlockSpec((4, W), lambda i: (0, 0)),             # resident table
                pl.BlockSpec((n_words, W), lambda i: (0, 0)),       # resident mask
            ],
            out_specs=pl.BlockSpec((TR, W), lambda i: (i, 0)),
        ),
        compiler_params=pltpu.CompilerParams(
            dimension_semantics=("parallel",),
            vmem_limit_bytes=vmem_limit),
    )(bits, tab, mask)

    # Row r holds edges r*G .. r*G+G-1; the reshape is a free row-major bitcast.
    out_full = out_packed.reshape(rows_pad * G, D)
    return out_full[:E] if trim_output else out_full


def ast_edge_encoder_ref(edge_attr, table_type, table_dir):
    """Pure-JAX reference matching the PyTorch forward."""
    return table_type[edge_attr[:, 0]] + table_dir[edge_attr[:, 1]]


if __name__ == "__main__":
    key = jax.random.PRNGKey(0)
    k_t, k_d, k_idx = jax.random.split(key, 3)

    emb_dim = 32      # packed path (single-word bit pack, G=16, W=512)
    num_edges = 100   # not a multiple of the pack factor -> exercises padding

    # torch.nn.Embedding default init is N(0, 1).
    table_type = jax.random.normal(k_t, (2, emb_dim), dtype=jnp.float32)
    table_dir = jax.random.normal(k_d, (2, emb_dim), dtype=jnp.float32)

    # edge_attr[:,0]: AST edge (0) vs next-token edge (1)
    # edge_attr[:,1]: original (0) vs inverse (1) direction
    edge_attr = jax.random.randint(k_idx, (num_edges, 2), 0, 2, dtype=jnp.int32)

    out = jax.block_until_ready(ast_edge_encoder(edge_attr, table_type, table_dir))
    ref = ast_edge_encoder_ref(edge_attr, table_type, table_dir)
    assert out.shape == (num_edges, emb_dim)
    assert jnp.allclose(out, ref, atol=1e-6), "mismatch vs reference (packed)"

    # Exercise the other code paths at small shapes:
    #   d=128 -> simple lane-dense path; d=10 -> multi-word packed path (G=64).
    for d in (128, 10):
        tt = jax.random.normal(k_t, (2, d), dtype=jnp.float32)
        td = jax.random.normal(k_d, (2, d), dtype=jnp.float32)
        o = jax.block_until_ready(ast_edge_encoder(edge_attr, tt, td))
        r = ast_edge_encoder_ref(edge_attr, tt, td)
        assert o.shape == (num_edges, d)
        assert jnp.allclose(o, r, atol=1e-6), f"mismatch vs reference (D={d})"

    print("KERNEL_OK")
</pallas_src>

<mosaic_0001>
module attributes {stable_mosaic.version = 11 : i64} {
  func.func @kernel(%arg0: i32, %arg1: memref<8x2xi32, #tpu.memory_space<vmem>>, %arg2: memref<4x512xf32, #tpu.memory_space<vmem>>, %arg3: memref<1x512xi32, #tpu.memory_space<vmem>>, %arg4: memref<8x512xf32, #tpu.memory_space<vmem>>) attributes {dimension_semantics = [#tpu.dimension_semantics<parallel>], iteration_bounds = array<i64: 1>, scalar_prefetch = 0 : i64, scratch_operands = 0 : i64, tpu.core_type = #tpu.core_type<tc>, window_params = [{transform_indices = @transform_0, window_bounds = array<i64: 8, 2>}, {pipeline_mode = #tpu.pipeline_mode<synchronous>, transform_indices = @transform_1, window_bounds = array<i64: 4, 512>}, {pipeline_mode = #tpu.pipeline_mode<synchronous>, transform_indices = @transform_2, window_bounds = array<i64: 1, 512>}, {transform_indices = @transform_3, window_bounds = array<i64: 8, 512>}]} {
    %c0 = arith.constant 0 : index
    %c0_0 = arith.constant 0 : index
    %0 = vector.load %arg1[%c0, %c0_0] : memref<8x2xi32, #tpu.memory_space<vmem>>, vector<8x1xi32>
    %c0_1 = arith.constant 0 : index
    %c0_2 = arith.constant 0 : index
    %1 = vector.load %arg3[%c0_1, %c0_2] : memref<1x512xi32, #tpu.memory_space<vmem>>, vector<1x512xi32>
    %2 = vector.broadcast %0 : vector<8x1xi32> to vector<8x512xi32>
    %3 = vector.broadcast %1 : vector<1x512xi32> to vector<8x512xi32>
    %4 = arith.andi %2, %3 : vector<8x512xi32>
    %c0_i32 = arith.constant 0 : i32
    %5 = vector.broadcast %c0_i32 : i32 to vector<8x512xi32>
    %6 = arith.cmpi ne, %4, %5 : vector<8x512xi32>
    %c0_3 = arith.constant 0 : index
    %c1 = arith.constant 1 : index
    %7 = vector.load %arg1[%c0_3, %c1] : memref<8x2xi32, #tpu.memory_space<vmem>>, vector<8x1xi32>
    %c0_4 = arith.constant 0 : index
    %c0_5 = arith.constant 0 : index
    %8 = vector.load %arg3[%c0_4, %c0_5] : memref<1x512xi32, #tpu.memory_space<vmem>>, vector<1x512xi32>
    %9 = vector.broadcast %7 : vector<8x1xi32> to vector<8x512xi32>
    %10 = vector.broadcast %8 : vector<1x512xi32> to vector<8x512xi32>
    %11 = arith.andi %9, %10 : vector<8x512xi32>
    %c0_i32_6 = arith.constant 0 : i32
    %12 = vector.broadcast %c0_i32_6 : i32 to vector<8x512xi32>
    %13 = arith.cmpi ne, %11, %12 : vector<8x512xi32>
    %c1_7 = arith.constant 1 : index
    %c0_8 = arith.constant 0 : index
    %14 = vector.load %arg2[%c1_7, %c0_8] : memref<4x512xf32, #tpu.memory_space<vmem>>, vector<1x512xf32>
    %c0_9 = arith.constant 0 : index
    %c0_10 = arith.constant 0 : index
    %15 = vector.load %arg2[%c0_9, %c0_10] : memref<4x512xf32, #tpu.memory_space<vmem>>, vector<1x512xf32>
    %16 = vector.shape_cast %14 : vector<1x512xf32> to vector<1x512xf32>
    %17 = vector.broadcast %16 : vector<1x512xf32> to vector<8x512xf32>
    %18 = vector.shape_cast %15 : vector<1x512xf32> to vector<1x512xf32>
    %19 = vector.broadcast %18 : vector<1x512xf32> to vector<8x512xf32>
    %20 = arith.select %13, %17, %19 : vector<8x512xi1>, vector<8x512xf32>
    %c3 = arith.constant 3 : index
    %c0_11 = arith.constant 0 : index
    %21 = vector.load %arg2[%c3, %c0_11] : memref<4x512xf32, #tpu.memory_space<vmem>>, vector<1x512xf32>
    %c2 = arith.constant 2 : index
    %c0_12 = arith.constant 0 : index
    %22 = vector.load %arg2[%c2, %c0_12] : memref<4x512xf32, #tpu.memory_space<vmem>>, vector<1x512xf32>
    %23 = vector.shape_cast %21 : vector<1x512xf32> to vector<1x512xf32>
    %24 = vector.broadcast %23 : vector<1x512xf32> to vector<8x512xf32>
    %25 = vector.shape_cast %22 : vector<1x512xf32> to vector<1x512xf32>
    %26 = vector.broadcast %25 : vector<1x512xf32> to vector<8x512xf32>
    %27 = arith.select %13, %24, %26 : vector<8x512xi1>, vector<8x512xf32>
    %28 = arith.select %6, %27, %20 : vector<8x512xi1>, vector<8x512xf32>
    %c0_13 = arith.constant 0 : index
    %c0_14 = arith.constant 0 : index
    %29 = vector.load %arg4[%c0_13, %c0_14] : memref<8x512xf32, #tpu.memory_space<vmem>>, vector<8x512xf32>
    tpu.vector_store %arg4[%c0_13, %c0_14], %28 {strides = array<i32>} : memref<8x512xf32, #tpu.memory_space<vmem>>, vector<8x512xf32>,
    return
  }
  func.func @transform_0(%arg0: i32) -> (i32, i32) {
    %c0_i32 = arith.constant 0 : i32
    %c0_i32_0 = arith.constant 0 : i32
    return %arg0, %c0_i32 : i32, i32
  }
  func.func @transform_1(%arg0: i32) -> (i32, i32) {
    %c0_i32 = arith.constant 0 : i32
    %c0_i32_0 = arith.constant 0 : i32
    %c0_i32_1 = arith.constant 0 : i32
    return %c0_i32, %c0_i32_0 : i32, i32
  }
  func.func @transform_2(%arg0: i32) -> (i32, i32) {
    %c0_i32 = arith.constant 0 : i32
    %c0_i32_0 = arith.constant 0 : i32
    %c0_i32_1 = arith.constant 0 : i32
    return %c0_i32, %c0_i32_0 : i32, i32
  }
  func.func @transform_3(%arg0: i32) -> (i32, i32) {
    %c0_i32 = arith.constant 0 : i32
    %c0_i32_0 = arith.constant 0 : i32
    return %arg0, %c0_i32 : i32, i32
  }
}

</mosaic_0001>

<llo_original>
// kernel: tile.23
$region0: #{tile.23}
  #allocation0 [shape = 's32[1]{0}', space=sflag, size = 0x4, scoped, tag = 'scoped memory for tile.23']
  %s0 = inlined_call_operand.vmem [shape: f32[32], index: 0, kind: input, shape index: {}]
  %s1 = inlined_call_operand.vmem [shape: f32[16,32], index: 1, kind: output, shape index: {}]
  // Predicated region
  $region2: #{tile.23} parent=0 // pred_check
    _
  $region3: #{tile.23} parent=0 // pred_check_branch
    %3 = sbr.rel (0) target = $region5
  $region4: #{tile.23} parent=0 // pred_region
    _
  $region5: #{tile.23} parent=0 // pred_fallthru
    _
  %v4 = vld [vmem:[%s0] ss:$0 sm:$0xff]
  %5 = vst [vmem:[%s1] sm:$0xff] %v4
  %s6 = scalar_lea.vmem %s1, 8
  %7 = vst [vmem:[%s6] sm:$0xff] %v4

// kernel: tile.36
$region0: #{tile.36}
  %s0 = inlined_call_operand.vmem [shape: f32[16,32], index: 0, kind: input, shape index: {}]
  %s1 = inlined_call_operand.vmem [shape: f32[1,512], index: 1, kind: output, shape index: {}]
  $region1: #{tile.36} parent=0
    #allocation0 [shape = 'u8[16384]{0}', space=vmem, size = 0x4000, scoped, tag = 'scoped mem for output reshape']
    %v2 = vld [vmem:[%s0] ss:$4 sm:$0xf]
    %vm3 = vcmask 261120
    %4 = vst.msk [vmem:[#allocation0] ss:$8 sm:$0xf] %vm3, %v2
    %s5 = scalar_lea.vmem %s0, 3
    %v6 = vld [vmem:[%s5] ss:$4 sm:$0xf]
    %7 = vrot.lane.b32.xlu0 %v6, 96
    %v8 = vpop.permute.xlu0 %7
    %vm9 = vcmask 1048320
    %10 = vst.msk [vmem:[#allocation0] ss:$8 sm:$0xf] %vm9, %v8
    %s11 = scalar_lea.vmem %s0, 2
    %v12 = vld [vmem:[%s11] ss:$4 sm:$0xf]
    %13 = vrot.lane.b32.xlu0 %v12, 64
    %v14 = vpop.permute.xlu0 %13
    %vm15 = vcmask 785920
    %16 = vst.msk [vmem:[#allocation0] ss:$8 sm:$0xf] %vm15, %v14
    %s17 = scalar_lea.vmem %s0, 1
    %v18 = vld [vmem:[%s17] ss:$4 sm:$0xf]
    %19 = vrot.lane.b32.xlu0 %v18, 32
    %v20 = vpop.permute.xlu0 %19
    %vm21 = vcmask 523520
    %22 = vst.msk [vmem:[#allocation0] ss:$8 sm:$0xf] %vm21, %v20
    %s24 = sshllo.u32 0, 1
    %v26 = vld [vmem:[#allocation0] sm:%s24]
    %s27 = sshllo.u32 0, 1
    %28 = vst [vmem:[%s1] sm:%s27] %v26
    %s29 = scalar_lea.vmem [#allocation0], 8
    %v30 = vld [vmem:[%s29] sm:%s24]
    %s31 = sshllo.u32 0, 1
    %s32 = scalar_lea.vmem %s1, 1
    %33 = vst [vmem:[%s32] sm:%s31] %v30
    %s34 = scalar_lea.vmem [#allocation0], 16
    %v35 = vld [vmem:[%s34] sm:%s24]
    %s36 = sshllo.u32 0, 1
    %s37 = smul.addr 1, 2
    %s38 = scalar_lea.vmem %s1, %s37
    %39 = vst [vmem:[%s38] sm:%s36] %v35
    %s40 = scalar_lea.vmem [#allocation0], 24
    %v41 = vld [vmem:[%s40] sm:%s24]
    %s42 = sshllo.u32 0, 1
    %s43 = smul.addr 1, 3
    %s44 = scalar_lea.vmem %s1, %s43
    %45 = vst [vmem:[%s44] sm:%s42] %v41

// kernel: ast_edge_encoder.1
$region0: #{ast_edge_encoder.1}
  #allocation0 [shape = 'u32[]', space=smem, size = 0x4, offset = 0x4, fixed_abs, tag = 'smem constant byte address 0x4 - core index']
  #allocation1 [shape = 'u32[144,128]{1,0:T(1,128)}', space=vmem, size = 0x12000, scoped, tag = 'internal scratch']
  %s0 = inlined_call_operand.vmem [shape: u32[8,2], index: 0, kind: input, shape index: {}]
  %s1 = inlined_call_operand.vmem [shape: f32[4,512], index: 1, kind: input, shape index: {}]
  %s2 = inlined_call_operand.vmem [shape: u32[1,512], index: 2, kind: input, shape index: {}]
  %s3 = inlined_call_operand.vmem [shape: f32[8,512], index: 3, kind: output, shape index: {}]
  %s4 = sld [smem:[#allocation0]]
  $region22: #{ast_edge_encoder.1} parent=0
    _
  %s6 = ssub.s32 1, %s4
  %s7 = scalar_select 0, %s6, %s4
  // Predicated region
  $region2: #{ast_edge_encoder.1} parent=0 // pred_check
    _
  $region3: #{ast_edge_encoder.1} parent=0 // pred_check_branch
    %9 = sbr.rel (0) target = $region5
  $region4: #{ast_edge_encoder.1} parent=0 // pred_region
    _
  $region5: #{ast_edge_encoder.1} parent=0 // pred_fallthru
    _
  // Predicated region
  $region6: #{ast_edge_encoder.1} parent=0 // pred_check
    _
  $region7: #{ast_edge_encoder.1} parent=0 // pred_check_branch
    %11 = sbr.rel (0) target = $region9
  $region8: #{ast_edge_encoder.1} parent=0 // pred_region
    _
  $region9: #{ast_edge_encoder.1} parent=0 // pred_fallthru
    _
  // Predicated region
  $region10: #{ast_edge_encoder.1} parent=0 // pred_check
    _
  $region11: #{ast_edge_encoder.1} parent=0 // pred_check_branch
    %13 = sbr.rel (0) target = $region13
  $region12: #{ast_edge_encoder.1} parent=0 // pred_region
    _
  $region13: #{ast_edge_encoder.1} parent=0 // pred_fallthru
    _
  %v14 = vld [vmem:[%s0] sm:$0xff]
  %v15 = vld [vmem:[%s2] sm:$0xf]
  %16 = vset.pattern.permute.xlu0 0
  %17 = vperm.xlu0 %16, %v14
  %v18 = vpop.permute.xlu0 %17
  %v19 = vlaneseq
  %v20 = vshrl.u32 %v19, 7
  %v21 = vsub.s32 0, %v20
  %v22 = vrot.slane %v15, %v21
  %v23 = vlaneseq
  %v24 = vshrl.u32 %v23, 7
  %v25 = vsub.s32 1, %v24
  %v26 = vrot.slane %v15, %v25
  %v27 = vlaneseq
  %v28 = vshrl.u32 %v27, 7
  %v29 = vsub.s32 2, %v28
  %v30 = vrot.slane %v15, %v29
  %v31 = vlaneseq
  %v32 = vshrl.u32 %v31, 7
  %v33 = vsub.s32 3, %v32
  %v34 = vrot.slane %v15, %v33
  %v35 = vand.u32 %v18, %v22
  %v36 = vand.u32 %v18, %v26
  %v37 = vand.u32 %v18, %v30
  %v38 = vand.u32 %v18, %v34
  %vm39 = vcmp.ne.s32.totalorder %v35, 0
  %vm40 = vcmp.ne.s32.totalorder %v36, 0
  %vm41 = vcmp.ne.s32.totalorder %v37, 0
  %vm42 = vcmp.ne.s32.totalorder %v38, 0
  %43 = vset.pattern.permute.xlu0 1
  %44 = vperm.xlu0 %43, %v14
  %v45 = vpop.permute.xlu0 %44
  %v46 = vand.u32 %v45, %v22
  %v47 = vand.u32 %v45, %v26
  %v48 = vand.u32 %v45, %v30
  %v49 = vand.u32 %v45, %v34
  %vm50 = vcmp.ne.s32.totalorder %v46, 0
  %vm51 = vcmp.ne.s32.totalorder %v47, 0
  %vm52 = vcmp.ne.s32.totalorder %v48, 0
  %vm53 = vcmp.ne.s32.totalorder %v49, 0
  %s54 = scalar_lea.vmem %s1, 1
  %v55 = vld [vmem:[%s54] ss:$4 sm:$0xf]
  %v56 = vld [vmem:[%s1] ss:$4 sm:$0xf]
  %v58 = vlaneseq
  %v59 = vshrl.u32 %v58, 7
  %v60 = vsub.s32 0, %v59
  %v61 = vrot.slane %v55, %v60
  %v62 = vlaneseq
  %v63 = vshrl.u32 %v62, 7
  %v64 = vsub.s32 1, %v63
  %v65 = vrot.slane %v55, %v64
  %v66 = vlaneseq
  %v67 = vshrl.u32 %v66, 7
  %v68 = vsub.s32 2, %v67
  %v69 = vrot.slane %v55, %v68
  %v70 = vlaneseq
  %v71 = vshrl.u32 %v70, 7
  %v72 = vsub.s32 3, %v71
  %v73 = vrot.slane %v55, %v72
  %v79 = vlaneseq
  %v80 = vshrl.u32 %v79, 7
  %v81 = vsub.s32 0, %v80
  %v82 = vrot.slane %v56, %v81
  %v83 = vlaneseq
  %v84 = vshrl.u32 %v83, 7
  %v85 = vsub.s32 1, %v84
  %v86 = vrot.slane %v56, %v85
  %v87 = vlaneseq
  %v88 = vshrl.u32 %v87, 7
  %v89 = vsub.s32 2, %v88
  %v90 = vrot.slane %v56, %v89
  %v91 = vlaneseq
  %v92 = vshrl.u32 %v91, 7
  %v93 = vsub.s32 3, %v92
  %v94 = vrot.slane %v56, %v93
  %v99 = vsel %vm50, %v61, %v82
  %v100 = vsel %vm51, %v65, %v86
  %v101 = vsel %vm52, %v69, %v90
  %v102 = vsel %vm53, %v73, %v94
  %s103 = scalar_lea.vmem %s1, 3
  %v104 = vld [vmem:[%s103] ss:$4 sm:$0xf]
  %s105 = scalar_lea.vmem %s1, 2
  %v106 = vld [vmem:[%s105] ss:$4 sm:$0xf]
  %v108 = vlaneseq
  %v109 = vshrl.u32 %v108, 7
  %v110 = vsub.s32 0, %v109
  %v111 = vrot.slane %v104, %v110
  %v112 = vlaneseq
  %v113 = vshrl.u32 %v112, 7
  %v114 = vsub.s32 1, %v113
  %v115 = vrot.slane %v104, %v114
  %v116 = vlaneseq
  %v117 = vshrl.u32 %v116, 7
  %v118 = vsub.s32 2, %v117
  %v119 = vrot.slane %v104, %v118
  %v120 = vlaneseq
  %v121 = vshrl.u32 %v120, 7
  %v122 = vsub.s32 3, %v121
  %v123 = vrot.slane %v104, %v122
  %v129 = vlaneseq
  %v130 = vshrl.u32 %v129, 7
  %v131 = vsub.s32 0, %v130
  %v132 = vrot.slane %v106, %v131
  %v133 = vlaneseq
  %v134 = vshrl.u32 %v133, 7
  %v135 = vsub.s32 1, %v134
  %v136 = vrot.slane %v106, %v135
  %v137 = vlaneseq
  %v138 = vshrl.u32 %v137, 7
  %v139 = vsub.s32 2, %v138
  %v140 = vrot.slane %v106, %v139
  %v141 = vlaneseq
  %v142 = vshrl.u32 %v141, 7
  %v143 = vsub.s32 3, %v142
  %v144 = vrot.slane %v106, %v143
  %v149 = vsel %vm50, %v111, %v132
  %v150 = vsel %vm51, %v115, %v136
  %v151 = vsel %vm52, %v119, %v140
  %v152 = vsel %vm53, %v123, %v144
  %v153 = vsel %vm39, %v149, %v99
  %v154 = vsel %vm40, %v150, %v100
  %v155 = vsel %vm41, %v151, %v101
  %v156 = vsel %vm42, %v152, %v102
  %157 = vst [vmem:[%s3] sm:$0xff] %v153
  %158 = vst [vmem:[%s3 + $0x8] sm:$0xff] %v154
  %159 = vst [vmem:[%s3 + $0x10] sm:$0xff] %v155
  %160 = vst [vmem:[%s3 + $0x18] sm:$0xff] %v156
  // Predicated region
  $region14: #{ast_edge_encoder.1} parent=0 // pred_check
    _
  $region15: #{ast_edge_encoder.1} parent=0 // pred_check_branch
    %162 = sbr.rel (0) target = $region17
  $region16: #{ast_edge_encoder.1} parent=0 // pred_region
    _
  $region17: #{ast_edge_encoder.1} parent=0 // pred_fallthru
    _
  // Predicated region
  $region18: #{ast_edge_encoder.1} parent=0 // pred_check
    _
  $region19: #{ast_edge_encoder.1} parent=0 // pred_check_branch
    %164 = sbr.rel (0) target = $region21
  $region20: #{ast_edge_encoder.1} parent=0 // pred_region
    _
  $region21: #{ast_edge_encoder.1} parent=0 // pred_fallthru
    _

</llo_original>
